<compile_context>
chip_gen: v7x
topology: tpu7x:2x2x1
jax: 0.10.0
libtpu: 0.0.40
codegen_flags: <defaults>
</compile_context>

<pallas_src>
import functools
import math

import jax
import jax.numpy as jnp
from jax import lax
from jax.experimental import pallas as pl
from jax.experimental.pallas import tpu as pltpu

LANE = 128
SUBLANE = 8
MAX_TM_FLAT = 4096          # flat path rows/block: 4096*128*4B = 2 MiB per buffer
MAX_TR_TOY = 2048           # toY path rows/block: 3*2048*128*4B = 3 MiB per buffer
VMEM_LIMIT_BYTES = 32 * 1024 * 1024   # covers double/triple-buffered tiles on all gens


def _round_up(x, m):
    return ((x + m - 1) // m) * m


@functools.lru_cache(maxsize=1)
def _is_multicore_chip() -> bool:
    """True on chips with >1 TensorCore behind one Pallas device (v7x)."""
    try:
        kind = jax.devices()[0].device_kind.lower()
    except Exception:
        return False
    return ("v7" in kind) or ("7x" in kind)


def _dim_semantics(nsplit):
    # CORE_PARALLEL is the only semantics that actually shards a grid axis
    # across TensorCores; fall back to plain strings on single-core chips.
    if nsplit > 1 and hasattr(pltpu, "CORE_PARALLEL"):
        return (pltpu.CORE_PARALLEL, pltpu.ARBITRARY)
    return ("arbitrary", "arbitrary")


def _pick_acc_rows(tile_rows):
    """Rows of the resident vector accumulator (widest that divides the tile)."""
    if tile_rows % 64 == 0:
        return 64
    if tile_rows % SUBLANE == 0:
        return SUBLANE
    return tile_rows


# ----------------------------------------------------------------------------
# Kernel 1 (flat path): sum of squared differences over a (rows, 128) view.
# Output: per-core (acc_rows, 128) vector partial sums (reduced in JAX glue).
# ----------------------------------------------------------------------------
def _sse_flat_kernel(p_ref, t_ref, out_ref, *, tm, rows, n_blocks, bpc,
                     acc_rows, mask_tail):
    i = pl.program_id(1)

    @pl.when(i == 0)
    def _():
        out_ref[...] = jnp.zeros_like(out_ref)

    d = p_ref[...].astype(jnp.float32) - t_ref[...].astype(jnp.float32)
    nfold = tm // acc_rows

    def _acc(v):
        # Fold rows into acc_rows-wide groups: independent VPU add streams,
        # hidden under the DMA; the single cross-lane reduce stays in JAX glue.
        out_ref[...] += (v * v).reshape(nfold, acc_rows, LANE).sum(axis=0)

    if not mask_tail:
        _acc(d)
    else:
        gblk = pl.program_id(0) * bpc + i
        edge = gblk >= n_blocks                       # duplicated (clamped) blocks
        if rows % tm != 0:                            # ragged last real block
            edge = jnp.logical_or(edge, gblk == n_blocks - 1)

        @pl.when(jnp.logical_not(edge))
        def _():
            _acc(d)

        @pl.when(edge)
        def _():
            grow = gblk * tm + lax.broadcasted_iota(jnp.int32, (tm, LANE), 0)
            _acc(jnp.where(grow < rows, d, 0.0))


def _sse_flat(pred, target):
    """Scalar f32 sum of (pred - target)**2 over all elements."""
    count = math.prod(pred.shape)
    flat_p = pred.reshape(-1)
    flat_t = target.reshape(-1)

    main = (count // LANE) * LANE
    tail_sse = jnp.float32(0.0)
    if main != count:
        # TODO(synk): ragged counts (count % 128 != 0) still slice a prefix
        # copy; the <128-element tail is summed in plain JAX.
        tp = lax.slice(flat_p, (main,), (count,)).astype(jnp.float32)
        tt = lax.slice(flat_t, (main,), (count,)).astype(jnp.float32)
        tail_sse = jnp.sum((tp - tt) ** 2)
        if main == 0:
            return tail_sse
        flat_p = lax.slice(flat_p, (0,), (main,))
        flat_t = lax.slice(flat_t, (0,), (main,))

    rows = main // LANE
    p2d = flat_p.reshape(rows, LANE)
    t2d = flat_t.reshape(rows, LANE)

    # Full-extent tile when it fits (no ragged edge block), else 2 MiB tiles.
    tm = rows if rows <= MAX_TM_FLAT else MAX_TM_FLAT
    n_blocks = pl.cdiv(rows, tm)
    acc_rows = _pick_acc_rows(tm)

    nsplit = 2 if (_is_multicore_chip() and acc_rows % SUBLANE == 0) else 1
    nsplit = min(nsplit, n_blocks)
    bpc = pl.cdiv(n_blocks, nsplit)
    mask_tail = (rows % tm != 0) or (nsplit * bpc != n_blocks)

    def in_map(c, i):
        # Clamp so duplicated blocks from the core split stay in-bounds; the
        # gated in-kernel mask zeroes their contribution.
        return (jnp.minimum(c * bpc + i, n_blocks - 1), 0)

    kern = functools.partial(_sse_flat_kernel, tm=tm, rows=rows,
                             n_blocks=n_blocks, bpc=bpc, acc_rows=acc_rows,
                             mask_tail=mask_tail)
    itemsize = jnp.dtype(pred.dtype).itemsize
    cost = pl.CostEstimate(flops=3 * main, transcendentals=0,
                           bytes_accessed=2 * main * itemsize)
    partials = pl.pallas_call(
        kern,
        out_shape=jax.ShapeDtypeStruct((nsplit * acc_rows, LANE), jnp.float32),
        grid_spec=pltpu.PrefetchScalarGridSpec(
            num_scalar_prefetch=0,
            grid=(nsplit, bpc),
            in_specs=[pl.BlockSpec((tm, LANE), in_map),
                      pl.BlockSpec((tm, LANE), in_map)],
            out_specs=pl.BlockSpec((acc_rows, LANE), lambda c, i: (c, 0)),
        ),
        compiler_params=pltpu.CompilerParams(
            dimension_semantics=_dim_semantics(nsplit),
            vmem_limit_bytes=VMEM_LIMIT_BYTES),
        cost_estimate=cost,
    )(p2d, t2d)
    return jnp.sum(partials, dtype=jnp.float32) + tail_sse


# ----------------------------------------------------------------------------
# Kernel 2 (toY path): fused RGB->Y weighted diff + square + reduce over
# lane-dense (1, 3, tr, 128) blocks of the (N, 3, HW/128, 128) view.
# ----------------------------------------------------------------------------
def _sse_toy_kernel(p_ref, t_ref, out_ref, *, coef, tr, rows, n_r, n_blocks,
                    bpc, acc_rows, mask_tail):
    i = pl.program_id(1)

    @pl.when(i == 0)
    def _():
        out_ref[...] = jnp.zeros_like(out_ref)

    c0, c1, c2 = coef
    # Y(p) - Y(t) == sum_k ck * (pk - tk): 3 fewer muls / 2 fewer adds than
    # forming Y(p) and Y(t) separately.
    d = (c0 * (p_ref[0, 0].astype(jnp.float32) - t_ref[0, 0].astype(jnp.float32))
         + c1 * (p_ref[0, 1].astype(jnp.float32) - t_ref[0, 1].astype(jnp.float32))
         + c2 * (p_ref[0, 2].astype(jnp.float32) - t_ref[0, 2].astype(jnp.float32)))
    nfold = tr // acc_rows

    def _acc(v):
        out_ref[...] += (v * v).reshape(nfold, acc_rows, LANE).sum(axis=0)

    if not mask_tail:
        _acc(d)
    else:
        gblk = pl.program_id(0) * bpc + i
        rblk = gblk % n_r
        edge = gblk >= n_blocks                       # duplicated (clamped) blocks
        if rows % tr != 0:                            # ragged last row-block
            edge = jnp.logical_or(edge, rblk == n_r - 1)

        @pl.when(jnp.logical_not(edge))
        def _():
            _acc(d)

        @pl.when(edge)
        def _():
            grow = rblk * tr + lax.broadcasted_iota(jnp.int32, (tr, LANE), 0)
            m = jnp.logical_and(grow < rows, gblk < n_blocks)
            _acc(jnp.where(m, d, 0.0))


def _sse_toy(pred, target, coef):
    """Scalar f32 sum of (Y(pred) - Y(target))**2 over the N*H*W Y pixels."""
    n, c, h, w = pred.shape
    assert c == 3, "toY=True expects 3-channel NCHW inputs"
    hw = h * w
    p3 = pred.reshape(n, 3, hw)
    t3 = target.reshape(n, 3, hw)
    hw_pad = _round_up(hw, LANE)
    if hw_pad != hw:
        # TODO(synk): H*W not a multiple of 128 still incurs a pad copy (the
        # padded zeros contribute 0 to the SSE); rare for image shapes.
        p3 = jnp.pad(p3, ((0, 0), (0, 0), (0, hw_pad - hw)))
        t3 = jnp.pad(t3, ((0, 0), (0, 0), (0, hw_pad - hw)))
    rows = hw_pad // LANE
    p4 = p3.reshape(n, 3, rows, LANE)
    t4 = t3.reshape(n, 3, rows, LANE)

    tr = rows if rows <= MAX_TR_TOY else MAX_TR_TOY   # full extent when small
    n_r = pl.cdiv(rows, tr)
    n_blocks = n * n_r
    acc_rows = _pick_acc_rows(tr)

    nsplit = 2 if (_is_multicore_chip() and acc_rows % SUBLANE == 0) else 1
    nsplit = min(nsplit, n_blocks)
    bpc = pl.cdiv(n_blocks, nsplit)
    mask_tail = (rows % tr != 0) or (nsplit * bpc != n_blocks)

    def in_map(ci, ii):
        blk = jnp.minimum(ci * bpc + ii, n_blocks - 1)
        return (blk // n_r, 0, blk % n_r, 0)

    in_block = (1, 3, tr, LANE)
    spec_kwargs = {}
    if _is_multicore_chip() and hasattr(pl, "Buffered"):
        # Deeper buffering hides the 3-segment strided DMA at v7x HBM rates.
        spec_kwargs["pipeline_mode"] = pl.Buffered(3)
    in_specs = [pl.BlockSpec(in_block, in_map, **spec_kwargs),
                pl.BlockSpec(in_block, in_map, **spec_kwargs)]

    kern = functools.partial(_sse_toy_kernel,
                             coef=tuple(float(x) for x in coef),
                             tr=tr, rows=rows, n_r=n_r, n_blocks=n_blocks,
                             bpc=bpc, acc_rows=acc_rows, mask_tail=mask_tail)
    itemsize = jnp.dtype(pred.dtype).itemsize
    cost = pl.CostEstimate(flops=10 * n * hw_pad, transcendentals=0,
                           bytes_accessed=2 * 3 * n * hw_pad * itemsize)
    partials = pl.pallas_call(
        kern,
        out_shape=jax.ShapeDtypeStruct((nsplit * acc_rows, LANE), jnp.float32),
        grid_spec=pltpu.PrefetchScalarGridSpec(
            num_scalar_prefetch=0,
            grid=(nsplit, bpc),
            in_specs=in_specs,
            out_specs=pl.BlockSpec((acc_rows, LANE), lambda ci, ii: (ci, 0)),
        ),
        compiler_params=pltpu.CompilerParams(
            dimension_semantics=_dim_semantics(nsplit),
            vmem_limit_bytes=VMEM_LIMIT_BYTES),
        cost_estimate=cost,
    )(p4, t4)
    return jnp.sum(partials, dtype=jnp.float32)


# ----------------------------------------------------------------------------
# Module wrapper (mirrors the PyTorch PSNRTXYLoss forward semantics exactly).
# ----------------------------------------------------------------------------
class PSNRTXYLoss:
    def __init__(self, loss_weight: float = 1.0, toY: bool = False):
        self.loss_weight = loss_weight
        self.toY = toY
        self.scale = 10.0 / math.log(10.0)
        if toY:
            # NOTE: matches the PyTorch module exactly (no /255, no +16 offset).
            self.coef = (65.481, 128.553, 24.966)

    def __call__(self, pred, target):
        pred = jnp.asarray(pred)
        target = jnp.asarray(target)
        if self.toY:
            n, _, h, w = pred.shape
            count = n * 1 * h * w                 # Y maps are (N, 1, H, W)
            sse = _sse_toy(pred, target, self.coef)
        else:
            count = math.prod(pred.shape)
            sse = _sse_flat(pred, target)
        mse = sse / jnp.float32(count)
        # TODO(synk): mse == 0 (identical inputs) yields +inf, same as PyTorch.
        psnr = jnp.float32(self.scale) * jnp.log(1.0 / mse)
        return jnp.float32(self.loss_weight) * psnr


# ----------------------------------------------------------------------------
# Pure-JAX reference for verification.
# ----------------------------------------------------------------------------
def _reference(pred, target, loss_weight, toY, coef):
    pred = jnp.asarray(pred, jnp.float32)
    target = jnp.asarray(target, jnp.float32)
    if toY:
        c = jnp.asarray(coef, jnp.float32).reshape(1, 3, 1, 1)
        pred = jnp.sum(pred * c, axis=1, keepdims=True)
        target = jnp.sum(target * c, axis=1, keepdims=True)
    mse = jnp.mean((pred - target) ** 2)
    scale = 10.0 / math.log(10.0)
    return loss_weight * scale * jnp.log(1.0 / mse)


if __name__ == "__main__":
    key = jax.random.PRNGKey(0)
    k1, k2, k3, k4 = jax.random.split(key, 4)

    # Case 1: toY=False, pred/target shaped (2, 4, 16, 16) NCHW, f32.
    pred = jax.random.uniform(k1, (2, 4, 16, 16), dtype=jnp.float32)
    target = jax.random.uniform(k2, (2, 4, 16, 16), dtype=jnp.float32)
    loss_fn = PSNRTXYLoss(loss_weight=1.0, toY=False)
    out = jax.block_until_ready(loss_fn(pred, target))
    ref = _reference(pred, target, 1.0, False, None)
    assert jnp.allclose(out, ref, rtol=1e-5, atol=1e-5), (out, ref)

    # Case 2: toY=True, pred/target shaped (2, 3, 16, 16) NCHW, f32.
    pred_y = jax.random.uniform(k3, (2, 3, 16, 16), dtype=jnp.float32)
    target_y = jax.random.uniform(k4, (2, 3, 16, 16), dtype=jnp.float32)
    loss_fn_y = PSNRTXYLoss(loss_weight=0.5, toY=True)
    out_y = jax.block_until_ready(loss_fn_y(pred_y, target_y))
    ref_y = _reference(pred_y, target_y, 0.5, True, loss_fn_y.coef)
    assert jnp.allclose(out_y, ref_y, rtol=1e-5, atol=1e-5), (out_y, ref_y)

    # Case 3: bf16 inputs stream straight into the kernel (in-kernel f32 cast).
    pred_b = pred.astype(jnp.bfloat16)
    target_b = target.astype(jnp.bfloat16)
    out_b = jax.block_until_ready(loss_fn(pred_b, target_b))
    ref_b = _reference(pred_b, target_b, 1.0, False, None)
    assert jnp.allclose(out_b, ref_b, rtol=1e-4, atol=1e-4), (out_b, ref_b)

    print("KERNEL_OK")
</pallas_src>

<mosaic_0001>
module attributes {stable_mosaic.version = 11 : i64} {
  func.func @_sse_flat_kernel(%arg0: i32, %arg1: i32, %arg2: memref<16x128xf32, #tpu.memory_space<vmem>>, %arg3: memref<16x128xf32, #tpu.memory_space<vmem>>, %arg4: memref<8x128xf32, #tpu.memory_space<vmem>>) attributes {dimension_semantics = [#tpu.dimension_semantics<arbitrary>, #tpu.dimension_semantics<arbitrary>], iteration_bounds = array<i64: 1, 1>, scalar_prefetch = 0 : i64, scratch_operands = 0 : i64, tpu.core_type = #tpu.core_type<tc>, window_params = [{transform_indices = @transform_0, window_bounds = array<i64: 16, 128>}, {transform_indices = @transform_1, window_bounds = array<i64: 16, 128>}, {transform_indices = @transform_2, window_bounds = array<i64: 8, 128>}]} {
    %c0_i32 = arith.constant 0 : i32
    %0 = arith.cmpi eq, %arg1, %c0_i32 : i32
    %1 = arith.extui %0 : i1 to i32
    %c0_i32_0 = arith.constant 0 : i32
    %2 = arith.cmpi ne, %1, %c0_i32_0 : i32
    scf.if %2 {
      %cst_8 = arith.constant 0.000000e+00 : f32
      %12 = vector.broadcast %cst_8 : f32 to vector<8x128xf32>
      %c0_9 = arith.constant 0 : index
      %c0_10 = arith.constant 0 : index
      %13 = vector.load %arg4[%c0_9, %c0_10] : memref<8x128xf32, #tpu.memory_space<vmem>>, vector<8x128xf32>
      tpu.vector_store %arg4[%c0_9, %c0_10], %12 {strides = array<i32>} : memref<8x128xf32, #tpu.memory_space<vmem>>, vector<8x128xf32>,
    } else {
    }
    %c0 = arith.constant 0 : index
    %c0_1 = arith.constant 0 : index
    %3 = vector.load %arg2[%c0, %c0_1] : memref<16x128xf32, #tpu.memory_space<vmem>>, vector<16x128xf32>
    %c0_2 = arith.constant 0 : index
    %c0_3 = arith.constant 0 : index
    %4 = vector.load %arg3[%c0_2, %c0_3] : memref<16x128xf32, #tpu.memory_space<vmem>>, vector<16x128xf32>
    %5 = arith.subf %3, %4 : vector<16x128xf32>
    %c0_4 = arith.constant 0 : index
    %c0_5 = arith.constant 0 : index
    %6 = vector.load %arg4[%c0_4, %c0_5] : memref<8x128xf32, #tpu.memory_space<vmem>>, vector<8x128xf32>
    %7 = arith.mulf %5, %5 : vector<16x128xf32>
    %8 = vector.shape_cast %7 : vector<16x128xf32> to vector<2x8x128xf32>
    %cst = arith.constant dense<0.000000e+00> : vector<8x128xf32>
    %9 = vector.multi_reduction <add>, %8, %cst [0] : vector<2x8x128xf32> to vector<8x128xf32>
    %10 = arith.addf %6, %9 : vector<8x128xf32>
    %c0_6 = arith.constant 0 : index
    %c0_7 = arith.constant 0 : index
    %11 = vector.load %arg4[%c0_6, %c0_7] : memref<8x128xf32, #tpu.memory_space<vmem>>, vector<8x128xf32>
    tpu.vector_store %arg4[%c0_6, %c0_7], %10 {strides = array<i32>} : memref<8x128xf32, #tpu.memory_space<vmem>>, vector<8x128xf32>,
    return
  }
  func.func @transform_0(%arg0: i32, %arg1: i32) -> (i32, i32) {
    %c1_i32 = arith.constant 1 : i32
    %0 = arith.muli %arg0, %c1_i32 : i32
    %1 = arith.addi %0, %arg1 : i32
    %c0_i32 = arith.constant 0 : i32
    %2 = arith.minsi %1, %c0_i32 : i32
    %c0_i32_0 = arith.constant 0 : i32
    %c0_i32_1 = arith.constant 0 : i32
    return %2, %c0_i32_0 : i32, i32
  }
  func.func @transform_1(%arg0: i32, %arg1: i32) -> (i32, i32) {
    %c1_i32 = arith.constant 1 : i32
    %0 = arith.muli %arg0, %c1_i32 : i32
    %1 = arith.addi %0, %arg1 : i32
    %c0_i32 = arith.constant 0 : i32
    %2 = arith.minsi %1, %c0_i32 : i32
    %c0_i32_0 = arith.constant 0 : i32
    %c0_i32_1 = arith.constant 0 : i32
    return %2, %c0_i32_0 : i32, i32
  }
  func.func @transform_2(%arg0: i32, %arg1: i32) -> (i32, i32) {
    %c0_i32 = arith.constant 0 : i32
    %c0_i32_0 = arith.constant 0 : i32
    return %arg0, %c0_i32 : i32, i32
  }
}

</mosaic_0001>

<llo_original>
// kernel: tpu_custom_call.1
$region0: #{tpu_custom_call.1}
  #allocation0 [shape = 'u32[]', space=smem, size = 0x4, offset = 0x4, fixed_abs, tag = 'smem constant byte address 0x4 - core index']
  #allocation1 [shape = 'u32[144,128]{1,0:T(1,128)}', space=vmem, size = 0x12000, scoped, tag = 'internal scratch']
  %s0 = inlined_call_operand.hbm [shape: f32[16,128], index: 0, kind: input, shape index: {}]
  %s1 = inlined_call_operand.hbm [shape: f32[16,128], index: 1, kind: input, shape index: {}]
  %s2 = inlined_call_operand.hbm [shape: f32[8,128], index: 2, kind: output, shape index: {}]
  %s3 = sld [smem:[#allocation0]]
  $region30: #{tpu_custom_call.1} parent=0
    _
  %s5 = ssub.s32 1, %s3
  %s6 = scalar_select 0, %s5, %s3
  $region1: #{tpu_custom_call.1} parent=0
    #allocation2 [shape = 'u8[8192]{0}', space=vmem, size = 0x2000, scoped, tag = 'input window, operand 0, single buffered']
    #allocation3 [shape = 's32[1]{0}', space=sflag, size = 0x4, scoped, tag = 'scoped memory for tpu_custom_call.1']
    #allocation4 [shape = 's32[1]{0}', space=sflag, size = 0x4, scoped, tag = 'scoped memory for tpu_custom_call.1']
    #allocation5 [shape = 'u8[8192]{0}', space=vmem, size = 0x2000, scoped, tag = 'input window, operand 1, single buffered']
    #allocation6 [shape = 's32[1]{0}', space=sflag, size = 0x4, scoped, tag = 'scoped memory for tpu_custom_call.1']
    #allocation7 [shape = 'u8[4096]{0}', space=vmem, size = 0x1000, scoped, tag = 'output window, operand 0, single buffered']
    %7 = vsyncpa [#allocation3], 0
    %8 = vsyncpa [#allocation6], 0
    %9 = vsyncpa [#allocation4], 0
    // Predicated region
    $region2: #{tpu_custom_call.1} parent=1 // pred_check
      _
    $region3: #{tpu_custom_call.1} parent=1 // pred_check_branch
      %11 = sbr.rel (0) target = $region5
    $region4: #{tpu_custom_call.1} parent=1 // pred_region
      %s12 = sadd.s32 0, 0
      %p13 = scmp.lt.s32.totalorder %s12, 0
      %s14 = scalar_select %p13, %s12, 0
      %s15 = smul.u32 2, %s14
      %s17 = ssub.s32 256, 256
      %18 = vsyncadd [#allocation3], %s17
      %s19 = smul.addr %s15, 128
      %s20 = scalar_lea.hbm %s0, %s19
      %s21 = sshll.u32 [#allocation2], 4
      %s22 = int_to_ptr.vmem [resolvable:$true] %s21
      %27 = dma.hbm_to_vmem [thread:$0]  %s20, 256, %s22, [#allocation3], 128, 128, 8
    $region5: #{tpu_custom_call.1} parent=1 // pred_fallthru
      _
    // Predicated region
    $region6: #{tpu_custom_call.1} parent=1 // pred_check
      _
    $region7: #{tpu_custom_call.1} parent=1 // pred_check_branch
      %29 = sbr.rel (0) target = $region9
    $region8: #{tpu_custom_call.1} parent=1 // pred_region
      %s30 = sadd.s32 0, 0
      %p31 = scmp.lt.s32.totalorder %s30, 0
      %s32 = scalar_select %p31, %s30, 0
      %s33 = smul.u32 2, %s32
      %s35 = ssub.s32 256, 256
      %36 = vsyncadd [#allocation6], %s35
      %s37 = smul.addr %s33, 128
      %s38 = scalar_lea.hbm %s1, %s37
      %s39 = sshll.u32 [#allocation5], 4
      %s40 = int_to_ptr.vmem [resolvable:$true] %s39
      %45 = dma.hbm_to_vmem [thread:$0]  %s38, 256, %s40, [#allocation6], 128, 128, 8
    $region9: #{tpu_custom_call.1} parent=1 // pred_fallthru
      _
    // Predicated region
    $region10: #{tpu_custom_call.1} parent=1 // pred_check
      _
    $region11: #{tpu_custom_call.1} parent=1 // pred_check_branch
      %47 = sbr.rel (0) target = $region13
    $region12: #{tpu_custom_call.1} parent=1 // pred_region
      %48 = dma.done [#allocation3], 256
    $region13: #{tpu_custom_call.1} parent=1 // pred_fallthru
      _
    // Predicated region
    $region14: #{tpu_custom_call.1} parent=1 // pred_check
      _
    $region15: #{tpu_custom_call.1} parent=1 // pred_check_branch
      %50 = sbr.rel (0) target = $region17
    $region16: #{tpu_custom_call.1} parent=1 // pred_region
      %51 = dma.done [#allocation6], 256
    $region17: #{tpu_custom_call.1} parent=1 // pred_fallthru
      _
    %s52 = sadd.s32 0, 0
    %p53 = scmp.lt.s32.totalorder %s52, 0
    %s54 = scalar_select %p53, %s52, 0
    %s55 = smul.u32 2, %s54
    %s56 = sadd.s32 0, 0
    %p57 = scmp.lt.s32.totalorder %s56, 0
    %s58 = scalar_select %p57, %s56, 0
    %s59 = smul.u32 2, %s58
    %p60 = scmp.eq.s32.totalorder 0, 0
    // Predicated region
    $region18: #{tpu_custom_call.1} parent=1 // pred_check
      %p61 = pneg %p60
    $region19: #{tpu_custom_call.1} parent=1 // pred_check_branch
      %63 = sbr.rel (%p61) target = $region21
    $region20: #{tpu_custom_call.1} parent=1 // pred_region
      %64 = vst [vmem:[#allocation7] sm:$0xff] 0.0
    $region21: #{tpu_custom_call.1} parent=1 // pred_fallthru
      _
    %v65 = vld [vmem:[#allocation2] sm:$0xff]
    %v66 = vld [vmem:[#allocation2 + $0x8] sm:$0xff]
    %v67 = vld [vmem:[#allocation5] sm:$0xff]
    %v68 = vld [vmem:[#allocation5 + $0x8] sm:$0xff]
    %v69 = vsub.f32 %v65, %v67
    %v70 = vsub.f32 %v66, %v68
    %v71 = vld [vmem:[#allocation7] sm:$0xff]
    %v72 = vmul.f32 %v69, %v69
    %v73 = vmul.f32 %v70, %v70
    %v74 = vadd.f32 %v72, %v73
    %v75 = vadd.f32 %v71, %v74
    %76 = vst [vmem:[#allocation7] sm:$0xff] %v75
    // Predicated region
    $region22: #{tpu_custom_call.1} parent=1 // pred_check
      _
    $region23: #{tpu_custom_call.1} parent=1 // pred_check_branch
      %78 = sbr.rel (0) target = $region25
    $region24: #{tpu_custom_call.1} parent=1 // pred_region
      %s80 = ssub.s32 128, 128
      %81 = vsyncadd [#allocation4], %s80
      %s83 = sshll.u32 [#allocation7], 4
      %s84 = int_to_ptr.vmem [resolvable:$true] %s83
      %86 = dma.vmem_to_hbm [thread:$0]  %s84, 128, %s2, [#allocation4]
    $region25: #{tpu_custom_call.1} parent=1 // pred_fallthru
      _
    // Predicated region
    $region26: #{tpu_custom_call.1} parent=1 // pred_check
      _
    $region27: #{tpu_custom_call.1} parent=1 // pred_check_branch
      %88 = sbr.rel (0) target = $region29
    $region28: #{tpu_custom_call.1} parent=1 // pred_region
      %89 = dma.done [#allocation4], 128
    $region29: #{tpu_custom_call.1} parent=1 // pred_fallthru
      _
    %90 = vsyncpa [#allocation3], 1
    %91 = vsyncpa [#allocation6], 1
    %92 = vsyncpa [#allocation4], 1

</llo_original>
